<compile_context>
chip_gen: v6e
topology: v6e:2x2x1
jax: 0.10.0
libtpu: 0.0.40
codegen_flags: <defaults>
</compile_context>

<pallas_src>
import functools

import jax
import jax.numpy as jnp
from jax.experimental import pallas as pl
from jax.experimental.pallas import tpu as pltpu


def _round_up(x, m):
    return ((x + m - 1) // m) * m


def _pick_vmem_limit_bytes():
    """Generation-aware scoped-VMEM limit (~3/4 physical, <=96 MiB)."""
    try:
        info = pltpu.get_tpu_info()
        cap = int(getattr(info, "vmem_capacity_bytes", 0) or 0)
        if cap > 0:
            return min(96 * 1024 * 1024, (cap * 3) // 4)
    except Exception:
        pass
    # Safe everywhere (v7x has 64 MiB physical VMEM).
    return 48 * 1024 * 1024


# ----------------------------------------------------------------------------
# Fused kernel: encoder conv (im2col matmul) + tanh + group-VQ argmin
# ----------------------------------------------------------------------------
def _fused_kernel(patches_ref, w_ref, b_ref, cb2_ref, c2b_ref, codes_ref,
                  *, n_groups, n_codes):
    # patches: (K, TILE_N) bf16    w: (H, K) bf16     b: (H, 1) f32
    # cb2:     (G*C, H)   bf16 (pre-doubled, block-diagonal)
    # c2b:     (G*C, 1)   f32  (||c||^2 + positivity bound)
    # codes:   (G, TILE_N) int32
    #
    # Encoder: feats = tanh(W @ patches + b), f32 accumulation on the MXU.
    feats = jnp.dot(w_ref[...], patches_ref[...],
                    preferred_element_type=jnp.float32)          # (H, TILE_N)
    feats = jnp.tanh(feats + b_ref[...])                         # f32, |f|<=1

    # One block-diagonal matmul gives 2*<f, c> for every group's codebook row.
    dots = jnp.dot(cb2_ref[...], feats.astype(cb2_ref.dtype),
                   preferred_element_type=jnp.float32)           # (G*C, TILE_N)

    # dist = ||c||^2 - 2<f,c> + bound  (>= 1 by construction, ||f||^2 dropped:
    # constant per frame/group, irrelevant to the argmin).
    dist = c2b_ref[...] - dots                                   # f32, > 1.0

    # Single-pass argmin: positive normal f32 bit patterns are monotone, so
    # pack (distance key, global codebook-row index) into one 32-bit word and
    # let a plain f32 min reduction do value + first-index tie-break at once.
    gc = n_groups * n_codes
    idx_bits = max(1, (gc - 1).bit_length())                     # 7 for GC=128
    idx_mask = (1 << idx_bits) - 1
    keys = pltpu.bitcast(dist, jnp.int32)                        # free reinterpret
    idx = jax.lax.broadcasted_iota(jnp.int32, dist.shape, 0)     # global row id
    packed = (keys & (~idx_mask)) | idx                          # (G*C, TILE_N)
    packed_f = pltpu.bitcast(packed, jnp.float32)                # still monotone

    rows = []
    for g in range(n_groups):                                    # unrolled, small
        pg = packed_f[g * n_codes:(g + 1) * n_codes, :]          # (C, TILE_N)
        m = jnp.min(pg, axis=0, keepdims=True)                   # (1, TILE_N)
        mi = pltpu.bitcast(m, jnp.int32)
        rows.append((mi & idx_mask) - (g * n_codes))             # within-group id
    codes_ref[...] = jnp.concatenate(rows, axis=0).astype(jnp.int32)


# ----------------------------------------------------------------------------
# SimCodec forward wrapper (glue: reshapes / padding / parameter plumbing)
# ----------------------------------------------------------------------------
class SimCodecPallas:
    def __init__(self, key, *, hidden=32, kernel=8, n_code_groups=2, n_codes=64,
                 tile_n=8192):
        assert hidden % n_code_groups == 0
        assert (n_code_groups * n_codes) % 128 == 0  # lane-dense distance matrix
        self.hidden = hidden
        self.kernel = kernel                 # conv kernel_size == stride
        self.n_code_groups = n_code_groups
        self.n_codes = n_codes
        self.group_dim = hidden // n_code_groups
        # TILE_N: frames per grid step; amortizes per-step pipeline overhead.
        self.tile_n = tile_n
        self.vmem_limit = _pick_vmem_limit_bytes()

        k_w, k_b, k_cb = jax.random.split(key, 3)
        # Encoder Conv1d weight (out=H, in=1, k=K) stored as (H, K) so that
        # feats_T = W @ patches_T keeps frames on the lane axis.
        enc_w = 0.1 * jax.random.normal(k_w, (hidden, kernel), jnp.float32)
        self.enc_w = enc_w.astype(jnp.bfloat16)
        self.enc_b = 0.1 * jax.random.normal(k_b, (hidden, 1), jnp.float32)

        # Per-group codebooks (n_groups, n_codes, group_dim), embedded
        # block-diagonally into one (G*C, H) matrix for a single MXU matmul.
        codebooks = jax.random.normal(
            k_cb, (n_code_groups, n_codes, self.group_dim), jnp.float32)
        gc = n_code_groups * n_codes
        cb_full = jnp.zeros((gc, hidden), jnp.float32)
        for g in range(n_code_groups):
            cb_full = cb_full.at[
                g * n_codes:(g + 1) * n_codes,
                g * self.group_dim:(g + 1) * self.group_dim].set(codebooks[g])

        # bf16-rounded codebook; ||c||^2 computed from the rounded values so
        # the kernel's argmin is self-consistent.
        cb_bf16 = cb_full.astype(jnp.bfloat16)
        cb_f32 = cb_bf16.astype(jnp.float32)
        c2 = jnp.sum(jnp.square(cb_f32), axis=1, keepdims=True)       # (G*C, 1)
        # Pre-double the codebook (exact in bf16: exponent bump only) so the
        # kernel never multiplies the distance matrix by 2.
        self.cb2 = (cb_f32 * 2.0).astype(jnp.bfloat16)                # (G*C, H)
        # Positivity offset: |tanh| <= 1  =>  |<f, 2c>| <= sum_i |2 c_i|.
        # Adding one global bound to every code keeps the argmin identical and
        # guarantees dist >= 1, so f32 bit patterns are monotone sort keys.
        bound = jnp.max(jnp.sum(jnp.abs(cb_f32 * 2.0), axis=1)) * 1.001 + 1.0
        self.c2b = (c2 + bound).astype(jnp.float32)                   # (G*C, 1)

    def __call__(self, x):
        # x: (B, T, 1) or (B, T) — raw waveform
        batch_size = x.shape[0]
        if x.ndim == 3 and x.shape[-1] == 1:
            x = jnp.squeeze(x, axis=-1)                    # (B, T)
        B, T = x.shape
        K = self.kernel
        Tp = T // K                                        # Conv1d drops remainder
        N = B * Tp

        # Tile selection: big tiles to amortize per-step overhead, but keep
        # >= 2 grid steps when possible so v7x can shard across both TCs.
        if N <= 128:
            tile_n = 128
        else:
            tile_n = min(self.tile_n, _round_up(pl.cdiv(N, 2), 128))
        n_pad = _round_up(N, tile_n)

        # Fused im2col: bf16 cast + pad on the flat contiguous waveform, then
        # ONE reshape+transpose into the lane-dense (K, N_pad) layout.
        x_flat = x[:, :Tp * K].reshape(N * K).astype(jnp.bfloat16)
        if n_pad != N:
            x_flat = jnp.pad(x_flat, (0, (n_pad - N) * K))
        patches_t = x_flat.reshape(n_pad, K).T                        # (K, N_pad)

        G, C, H = self.n_code_groups, self.n_codes, self.hidden
        GC = G * C
        grid = (n_pad // tile_n,)

        kernel_fn = functools.partial(_fused_kernel, n_groups=G, n_codes=C)

        cost = pl.CostEstimate(
            flops=2 * n_pad * (H * K + GC * H) + 6 * n_pad * GC,
            transcendentals=n_pad * H,
            bytes_accessed=(patches_t.size * 2          # bf16 patches in
                            + G * n_pad * 4             # int32 codes out
                            + H * K * 2 + H * 4         # encoder params
                            + GC * H * 2 + GC * 4),     # codebook + norms
        )

        codes = pl.pallas_call(
            kernel_fn,
            out_shape=jax.ShapeDtypeStruct((G, n_pad), jnp.int32),
            grid_spec=pltpu.PrefetchScalarGridSpec(
                num_scalar_prefetch=0,
                grid=grid,
                in_specs=[
                    pl.BlockSpec((K, tile_n), lambda i: (0, i)),   # patches_T
                    pl.BlockSpec((H, K), lambda i: (0, 0)),        # enc_w
                    pl.BlockSpec((H, 1), lambda i: (0, 0)),        # enc_b
                    pl.BlockSpec((GC, H), lambda i: (0, 0)),       # 2*codebook
                    pl.BlockSpec((GC, 1), lambda i: (0, 0)),       # ||c||^2+bound
                ],
                out_specs=pl.BlockSpec((G, tile_n), lambda i: (0, i)),
            ),
            compiler_params=pltpu.CompilerParams(
                dimension_semantics=("parallel",),
                vmem_limit_bytes=self.vmem_limit,
            ),
            cost_estimate=cost,
        )(patches_t, self.enc_w, self.enc_b, self.cb2, self.c2b)

        # (G, N_pad) -> drop pad frames -> (B, T', n_groups), matching
        # torch.stack([code.reshape(B, -1) for code in c], -1).
        codes = codes[:, :N].T.reshape(batch_size, Tp, G)
        return codes


if __name__ == "__main__":
    key = jax.random.PRNGKey(0)
    k_model, k_x = jax.random.split(key)

    model = SimCodecPallas(k_model, hidden=32, kernel=8,
                           n_code_groups=2, n_codes=64)

    # small deterministic input: batch=2, audio length=64 samples, trailing dim 1
    x = jax.random.normal(k_x, (2, 64, 1), jnp.float32)

    out = model(x)
    out = jax.block_until_ready(out)

    assert out.shape == (2, 8, 2), out.shape
    assert out.dtype == jnp.int32
    assert bool(jnp.all(out >= 0)) and bool(jnp.all(out < 64))
    print("KERNEL_OK")
</pallas_src>

<mosaic_0001>
module attributes {stable_mosaic.version = 11 : i64} {
  func.func @_fused_kernel(%arg0: i32, %arg1: memref<8x128xbf16, #tpu.memory_space<vmem>>, %arg2: memref<32x8xbf16, #tpu.memory_space<vmem>>, %arg3: memref<32x1xf32, #tpu.memory_space<vmem>>, %arg4: memref<128x32xbf16, #tpu.memory_space<vmem>>, %arg5: memref<128x1xf32, #tpu.memory_space<vmem>>, %arg6: memref<2x128xi32, #tpu.memory_space<vmem>>) attributes {dimension_semantics = [#tpu.dimension_semantics<parallel>], iteration_bounds = array<i64: 1>, scalar_prefetch = 0 : i64, scratch_operands = 0 : i64, tpu.core_type = #tpu.core_type<tc>, window_params = [{transform_indices = @transform_0, window_bounds = array<i64: 8, 128>}, {pipeline_mode = #tpu.pipeline_mode<synchronous>, transform_indices = @transform_1, window_bounds = array<i64: 32, 8>}, {pipeline_mode = #tpu.pipeline_mode<synchronous>, transform_indices = @transform_2, window_bounds = array<i64: 32, 1>}, {pipeline_mode = #tpu.pipeline_mode<synchronous>, transform_indices = @transform_3, window_bounds = array<i64: 128, 32>}, {pipeline_mode = #tpu.pipeline_mode<synchronous>, transform_indices = @transform_4, window_bounds = array<i64: 128, 1>}, {transform_indices = @transform_5, window_bounds = array<i64: 2, 128>}]} {
    %c0 = arith.constant 0 : index
    %c0_0 = arith.constant 0 : index
    %0 = vector.load %arg2[%c0, %c0_0] : memref<32x8xbf16, #tpu.memory_space<vmem>>, vector<32x8xbf16>
    %c0_1 = arith.constant 0 : index
    %c0_2 = arith.constant 0 : index
    %1 = vector.load %arg1[%c0_1, %c0_2] : memref<8x128xbf16, #tpu.memory_space<vmem>>, vector<8x128xbf16>
    %cst = arith.constant dense<0.000000e+00> : vector<32x128xf32>
    %2 = tpu.matmul %0, %1, %cst {dimension_numbers = #tpu.dot_dimension_numbers<[1], [0], [0], [1], [0, 0, 1, 1], [], []>} : vector<32x8xbf16>, vector<8x128xbf16>, vector<32x128xf32> -> vector<32x128xf32>
    %c0_3 = arith.constant 0 : index
    %c0_4 = arith.constant 0 : index
    %3 = vector.load %arg3[%c0_3, %c0_4] : memref<32x1xf32, #tpu.memory_space<vmem>>, vector<32x1xf32>
    %4 = vector.broadcast %3 : vector<32x1xf32> to vector<32x128xf32>
    %5 = arith.addf %2, %4 : vector<32x128xf32>
    %6 = math.tanh %5 : vector<32x128xf32>
    %c0_5 = arith.constant 0 : index
    %c0_6 = arith.constant 0 : index
    %7 = vector.load %arg4[%c0_5, %c0_6] : memref<128x32xbf16, #tpu.memory_space<vmem>>, vector<128x32xbf16>
    %8 = arith.truncf %6 : vector<32x128xf32> to vector<32x128xbf16>
    %cst_7 = arith.constant dense<0.000000e+00> : vector<128x128xf32>
    %9 = tpu.matmul %7, %8, %cst_7 {dimension_numbers = #tpu.dot_dimension_numbers<[1], [0], [0], [1], [0, 0, 1, 1], [], []>} : vector<128x32xbf16>, vector<32x128xbf16>, vector<128x128xf32> -> vector<128x128xf32>
    %c0_8 = arith.constant 0 : index
    %c0_9 = arith.constant 0 : index
    %10 = vector.load %arg5[%c0_8, %c0_9] : memref<128x1xf32, #tpu.memory_space<vmem>>, vector<128x1xf32>
    %11 = vector.broadcast %10 : vector<128x1xf32> to vector<128x128xf32>
    %12 = arith.subf %11, %9 : vector<128x128xf32>
    %13 = tpu.bitcast %12 : vector<128x128xf32> -> vector<128x128xi32>
    %14 = tpu.iota {dimensions = array<i32: 0>} : vector<128x128xi32>
    %c-128_i32 = arith.constant -128 : i32
    %15 = vector.broadcast %c-128_i32 : i32 to vector<128x128xi32>
    %16 = arith.andi %13, %15 : vector<128x128xi32>
    %17 = arith.ori %16, %14 : vector<128x128xi32>
    %18 = tpu.bitcast %17 : vector<128x128xi32> -> vector<128x128xf32>
    %19 = vector.extract_strided_slice %18 {offsets = [0, 0], sizes = [64, 128], strides = [1, 1]} : vector<128x128xf32> to vector<64x128xf32>
    %cst_10 = arith.constant dense<0x7F800000> : vector<128xf32>
    %20 = vector.multi_reduction <minimumf>, %19, %cst_10 [0] : vector<64x128xf32> to vector<128xf32>
    %21 = vector.shape_cast %20 : vector<128xf32> to vector<1x128xf32>
    %22 = tpu.bitcast %21 : vector<1x128xf32> -> vector<1x128xi32>
    %c127_i32 = arith.constant 127 : i32
    %23 = vector.broadcast %c127_i32 : i32 to vector<1x128xi32>
    %24 = arith.andi %22, %23 : vector<1x128xi32>
    %c0_i32 = arith.constant 0 : i32
    %25 = vector.broadcast %c0_i32 : i32 to vector<1x128xi32>
    %26 = arith.subi %24, %25 : vector<1x128xi32>
    %27 = vector.extract_strided_slice %18 {offsets = [64, 0], sizes = [64, 128], strides = [1, 1]} : vector<128x128xf32> to vector<64x128xf32>
    %cst_11 = arith.constant dense<0x7F800000> : vector<128xf32>
    %28 = vector.multi_reduction <minimumf>, %27, %cst_11 [0] : vector<64x128xf32> to vector<128xf32>
    %29 = vector.shape_cast %28 : vector<128xf32> to vector<1x128xf32>
    %30 = tpu.bitcast %29 : vector<1x128xf32> -> vector<1x128xi32>
    %c127_i32_12 = arith.constant 127 : i32
    %31 = vector.broadcast %c127_i32_12 : i32 to vector<1x128xi32>
    %32 = arith.andi %30, %31 : vector<1x128xi32>
    %c64_i32 = arith.constant 64 : i32
    %33 = vector.broadcast %c64_i32 : i32 to vector<1x128xi32>
    %34 = arith.subi %32, %33 : vector<1x128xi32>
    %35 = tpu.concatenate %26, %34 in 0 : vector<1x128xi32>, vector<1x128xi32> -> vector<2x128xi32>
    %c0_13 = arith.constant 0 : index
    %c0_14 = arith.constant 0 : index
    %36 = vector.load %arg6[%c0_13, %c0_14] : memref<2x128xi32, #tpu.memory_space<vmem>>, vector<2x128xi32>
    tpu.vector_store %arg6[%c0_13, %c0_14], %35 {strides = array<i32>} : memref<2x128xi32, #tpu.memory_space<vmem>>, vector<2x128xi32>,
    return
  }
  func.func @transform_0(%arg0: i32) -> (i32, i32) {
    %c0_i32 = arith.constant 0 : i32
    %c0_i32_0 = arith.constant 0 : i32
    return %c0_i32, %arg0 : i32, i32
  }
  func.func @transform_1(%arg0: i32) -> (i32, i32) {
    %c0_i32 = arith.constant 0 : i32
    %c0_i32_0 = arith.constant 0 : i32
    %c0_i32_1 = arith.constant 0 : i32
    return %c0_i32, %c0_i32_0 : i32, i32
  }
  func.func @transform_2(%arg0: i32) -> (i32, i32) {
    %c0_i32 = arith.constant 0 : i32
    %c0_i32_0 = arith.constant 0 : i32
    %c0_i32_1 = arith.constant 0 : i32
    return %c0_i32, %c0_i32_0 : i32, i32
  }
  func.func @transform_3(%arg0: i32) -> (i32, i32) {
    %c0_i32 = arith.constant 0 : i32
    %c0_i32_0 = arith.constant 0 : i32
    %c0_i32_1 = arith.constant 0 : i32
    return %c0_i32, %c0_i32_0 : i32, i32
  }
  func.func @transform_4(%arg0: i32) -> (i32, i32) {
    %c0_i32 = arith.constant 0 : i32
    %c0_i32_0 = arith.constant 0 : i32
    %c0_i32_1 = arith.constant 0 : i32
    return %c0_i32, %c0_i32_0 : i32, i32
  }
  func.func @transform_5(%arg0: i32) -> (i32, i32) {
    %c0_i32 = arith.constant 0 : i32
    %c0_i32_0 = arith.constant 0 : i32
    return %c0_i32, %arg0 : i32, i32
  }
}

</mosaic_0001>

<llo_original>
// kernel: tpu_custom_call.1
$region0: #{tpu_custom_call.1}
  #allocation0 [shape = 'u32[]', space=smem, size = 0x4, offset = 0x4, fixed_abs, tag = 'smem constant byte address 0x4 - core index']
  #allocation1 [shape = 'u32[144,128]{1,0:T(1,128)}', space=vmem, size = 0x12000, scoped, tag = 'internal scratch']
  %s0 = inlined_call_operand.vmem [shape: bf16[8,128], index: 0, kind: input, shape index: {}]
  %s1 = inlined_call_operand.vmem [shape: bf16[32,8], index: 1, kind: input, shape index: {}]
  %s2 = inlined_call_operand.vmem [shape: f32[32,1], index: 2, kind: input, shape index: {}]
  %s3 = inlined_call_operand.vmem [shape: bf16[128,32], index: 3, kind: input, shape index: {}]
  %s4 = inlined_call_operand.vmem [shape: f32[128,1], index: 4, kind: input, shape index: {}]
  %s5 = inlined_call_operand.hbm [shape: s32[2,128], index: 5, kind: output, shape index: {}]
  %s6 = sld [smem:[#allocation0]]
  $region30: #{tpu_custom_call.1} parent=0
    _
  %s8 = ssub.s32 1, %s6
  %s9 = scalar_select 0, %s8, %s6
  $region1: #{tpu_custom_call.1} parent=0
    #allocation2 [shape = 'u8[1024]{0}', space=vmem, size = 0x400, scoped, tag = 'output window, operand 0, single buffered']
    #allocation3 [shape = 's32[1]{0}', space=sflag, size = 0x4, scoped, tag = 'scoped memory for tpu_custom_call.1']
    %10 = vsyncpa [#allocation3], 0
    // Predicated region
    $region2: #{tpu_custom_call.1} parent=1 // pred_check
      _
    $region3: #{tpu_custom_call.1} parent=1 // pred_check_branch
      %12 = sbr.rel (0) target = $region5
    $region4: #{tpu_custom_call.1} parent=1 // pred_region
      _
    $region5: #{tpu_custom_call.1} parent=1 // pred_fallthru
      _
    // Predicated region
    $region6: #{tpu_custom_call.1} parent=1 // pred_check
      _
    $region7: #{tpu_custom_call.1} parent=1 // pred_check_branch
      %14 = sbr.rel (0) target = $region9
    $region8: #{tpu_custom_call.1} parent=1 // pred_region
      _
    $region9: #{tpu_custom_call.1} parent=1 // pred_fallthru
      _
    // Predicated region
    $region10: #{tpu_custom_call.1} parent=1 // pred_check
      _
    $region11: #{tpu_custom_call.1} parent=1 // pred_check_branch
      %16 = sbr.rel (0) target = $region13
    $region12: #{tpu_custom_call.1} parent=1 // pred_region
      _
    $region13: #{tpu_custom_call.1} parent=1 // pred_fallthru
      _
    // Predicated region
    $region14: #{tpu_custom_call.1} parent=1 // pred_check
      _
    $region15: #{tpu_custom_call.1} parent=1 // pred_check_branch
      %18 = sbr.rel (0) target = $region17
    $region16: #{tpu_custom_call.1} parent=1 // pred_region
      _
    $region17: #{tpu_custom_call.1} parent=1 // pred_fallthru
      _
    // Predicated region
    $region18: #{tpu_custom_call.1} parent=1 // pred_check
      _
    $region19: #{tpu_custom_call.1} parent=1 // pred_check_branch
      %20 = sbr.rel (0) target = $region21
    $region20: #{tpu_custom_call.1} parent=1 // pred_region
      _
    $region21: #{tpu_custom_call.1} parent=1 // pred_fallthru
      _
    %v22 = vld [vmem:[%s1] sm:$0xf]
    %v23 = vld [vmem:[%s1 + $0x4] sm:$0xf]
    %v24 = vld [vmem:[%s1 + $0x8] sm:$0xf]
    %v25 = vld [vmem:[%s1 + $0xc] sm:$0xf]
    %v26 = vld [vmem:[%s0] sm:$0xf]
    %v27 = vld [vmem:[%s2] sm:$0xff]
    %v28 = vld [vmem:[%s2 + $0x8] sm:$0xff]
    %v29 = vld [vmem:[%s2 + $0x10] sm:$0xff]
    %v30 = vld [vmem:[%s2 + $0x18] sm:$0xff]
    %32 = vset.pattern.permute.xlu0 0
    %33 = vperm.xlu0 %32, %v27
    %v34 = vpop.permute.xlu0 %33
    %37 = vset.pattern.permute.xlu0 0
    %38 = vperm.xlu0 %37, %v28
    %v39 = vpop.permute.xlu0 %38
    %42 = vset.pattern.permute.xlu0 0
    %43 = vperm.xlu0 %42, %v29
    %v44 = vpop.permute.xlu0 %43
    %47 = vset.pattern.permute.xlu0 0
    %48 = vperm.xlu0 %47, %v30
    %v49 = vpop.permute.xlu0 %48
    %v55 = vunpack.c.l.b16 %v22
    %v56 = vunpack.c.l.b16 %v23
    %v57 = vunpack.c.l.b16 %v24
    %v58 = vunpack.c.l.b16 %v25
    %v59 = vpack.c.b16 %v56, %v55
    %v60 = vpack.c.b16 %v58, %v57
    %vm61 = vcmask 64512
    %v63 = vsel %vm61, %v59, 0
    %v66 = vsel %vm61, %v60, 0
    %vm68 = vcmask 1043456
    %v70 = vsel %vm68, %v26, 0
    %72 = vmatprep.subr.bf16.mxu0 0
    %73 = vmatpush1.bf16.msra.mxu0 0
    %74 = vmatprep.subr.bf16.mxu0 0
    %75 = vmatpush1.bf16.msra.mxu0 0
    %76 = vmatprep.subr.bf16.mxu0 0
    %77 = vmatpush1.bf16.msra.mxu0 0
    %78 = vmatprep.subr.bf16.mxu0 0
    %79 = vmatpush1.bf16.msra.mxu0 0
    %80 = vmatprep.subr.bf16.mxu0 0
    %81 = vmatpush1.bf16.msra.mxu0 0
    %82 = vmatprep.subr.bf16.mxu0 0
    %83 = vmatpush1.bf16.msra.mxu0 0
    %84 = vmatprep.subr.bf16.mxu0 0
    %85 = vmatpush1.bf16.msra.mxu0 0
    %86 = vmatprep.subr.bf16.mxu0 0
    %87 = vmatpush1.bf16.msra.mxu0 %v70
    %88 = vmatprep.subr.bf16.mxu0 0
    %89 = vmatpush2.bf16.msra.mxu0 0
    %90 = vmatprep.subr.bf16.mxu0 0
    %91 = vmatpush2.bf16.msra.mxu0 0
    %92 = vmatprep.subr.bf16.mxu0 0
    %93 = vmatpush2.bf16.msra.mxu0 0
    %94 = vmatprep.subr.bf16.mxu0 0
    %95 = vmatpush2.bf16.msra.mxu0 0
    %96 = vmatprep.subr.bf16.mxu0 0
    %97 = vmatpush2.bf16.msra.mxu0 0
    %98 = vmatprep.subr.bf16.mxu0 0
    %99 = vmatpush2.bf16.msra.mxu0 0
    %100 = vmatprep.subr.bf16.mxu0 0
    %101 = vmatpush2.bf16.msra.mxu0 0
    %102 = vmatprep.subr.bf16.mxu0 0
    %103 = vmatpush2.bf16.msra.mxu0 0
    %104 = vmatprep.mubr.bf16.mxu0 0
    %105 = vmatmul.mubr.bf16.gmra.mxu0 %v63
    %v106 = vpop.f32.mrf.mxu0
    %v107 = vadd.f32 %v34, %v106
    %v108 = vpop.f32.mrf.mxu0
    %v109 = vpop.f32.mrf.mxu0
    %v110 = vadd.f32 %v39, %v109
    %v111 = vpop.f32.mrf.mxu0
    %112 = vmatprep.mubr.bf16.mxu0 0
    %113 = vmatmul.mubr.bf16.gmra.mxu0 %v66
    %v114 = vpop.f32.mrf.mxu0
    %v115 = vadd.f32 %v44, %v114
    %v116 = vpop.f32.mrf.mxu0
    %v117 = vpop.f32.mrf.mxu0
    %v118 = vadd.f32 %v49, %v117
    %v119 = vpop.f32.mrf.mxu0
    %120 = vdwg.mxu0
    %v121 = vtanh.pop %v107
    %v122 = vtanh.pop %v110
    %v123 = vtanh.pop %v115
    %v124 = vtanh.pop %v118
    %v125 = vld [vmem:[%s3] sm:$0xf]
    %v126 = vld [vmem:[%s3 + $0x4] sm:$0xf]
    %v127 = vld [vmem:[%s3 + $0x8] sm:$0xf]
    %v128 = vld [vmem:[%s3 + $0xc] sm:$0xf]
    %v129 = vld [vmem:[%s3 + $0x10] sm:$0xf]
    %v130 = vld [vmem:[%s3 + $0x14] sm:$0xf]
    %v131 = vld [vmem:[%s3 + $0x18] sm:$0xf]
    %v132 = vld [vmem:[%s3 + $0x1c] sm:$0xf]
    %v133 = vld [vmem:[%s3 + $0x20] sm:$0xf]
    %v134 = vld [vmem:[%s3 + $0x24] sm:$0xf]
    %v135 = vld [vmem:[%s3 + $0x28] sm:$0xf]
    %v136 = vld [vmem:[%s3 + $0x2c] sm:$0xf]
    %v137 = vld [vmem:[%s3 + $0x30] sm:$0xf]
    %v138 = vld [vmem:[%s3 + $0x34] sm:$0xf]
    %v139 = vld [vmem:[%s3 + $0x38] sm:$0xf]
    %v140 = vld [vmem:[%s3 + $0x3c] sm:$0xf]
    %v141 = vpack.c.bf16 %v122, %v121
    %v142 = vpack.c.bf16 %v124, %v123
    %v159 = vunpack.c.l.b16 %v125
    %v160 = vunpack.c.l.b16 %v126
    %v161 = vunpack.c.l.b16 %v127
    %v162 = vunpack.c.l.b16 %v128
    %v163 = vunpack.c.l.b16 %v129
    %v164 = vunpack.c.l.b16 %v130
    %v165 = vunpack.c.l.b16 %v131
    %v166 = vunpack.c.l.b16 %v132
    %v167 = vunpack.c.l.b16 %v133
    %v168 = vunpack.c.l.b16 %v134
    %v169 = vunpack.c.l.b16 %v135
    %v170 = vunpack.c.l.b16 %v136
    %v171 = vunpack.c.l.b16 %v137
    %v172 = vunpack.c.l.b16 %v138
    %v173 = vunpack.c.l.b16 %v139
    %v174 = vunpack.c.l.b16 %v140
    %v175 = vpack.c.b16 %v160, %v159
    %v176 = vpack.c.b16 %v162, %v161
    %v177 = vpack.c.b16 %v164, %v163
    %v178 = vpack.c.b16 %v166, %v165
    %v179 = vpack.c.b16 %v168, %v167
    %v180 = vpack.c.b16 %v170, %v169
    %v181 = vpack.c.b16 %v172, %v171
    %v182 = vpack.c.b16 %v174, %v173
    %vm183 = vcmask 261120
    %v185 = vsel %vm183, %v175, 0
    %v188 = vsel %vm183, %v176, 0
    %v191 = vsel %vm183, %v177, 0
    %v194 = vsel %vm183, %v178, 0
    %v197 = vsel %vm183, %v179, 0
    %v200 = vsel %vm183, %v180, 0
    %v203 = vsel %vm183, %v181, 0
    %v206 = vsel %vm183, %v182, 0
    %208 = vmatprep.subr.bf16.mxu0 0
    %209 = vmatpush1.bf16.msra.mxu0 0
    %210 = vmatprep.subr.bf16.mxu0 0
    %211 = vmatpush1.bf16.msra.mxu0 0
    %212 = vmatprep.subr.bf16.mxu0 0
    %213 = vmatpush1.bf16.msra.mxu0 0
    %214 = vmatprep.subr.bf16.mxu0 0
    %215 = vmatpush1.bf16.msra.mxu0 0
    %216 = vmatprep.subr.bf16.mxu0 0
    %217 = vmatpush1.bf16.msra.mxu0 0
    %218 = vmatprep.subr.bf16.mxu0 0
    %219 = vmatpush1.bf16.msra.mxu0 0
    %220 = vmatprep.subr.bf16.mxu0 0
    %221 = vmatpush1.bf16.msra.mxu0 %v142
    %222 = vmatprep.subr.bf16.mxu0 0
    %223 = vmatpush1.bf16.msra.mxu0 %v141
    %224 = vmatprep.subr.bf16.mxu0 0
    %225 = vmatpush2.bf16.msra.mxu0 0
    %226 = vmatprep.subr.bf16.mxu0 0
    %227 = vmatpush2.bf16.msra.mxu0 0
    %228 = vmatprep.subr.bf16.mxu0 0
    %229 = vmatpush2.bf16.msra.mxu0 0
    %230 = vmatprep.subr.bf16.mxu0 0
    %231 = vmatpush2.bf16.msra.mxu0 0
    %232 = vmatprep.subr.bf16.mxu0 0
    %233 = vmatpush2.bf16.msra.mxu0 0
    %234 = vmatprep.subr.bf16.mxu0 0
    %235 = vmatpush2.bf16.msra.mxu0 0
    %236 = vmatprep.subr.bf16.mxu0 0
    %237 = vmatpush2.bf16.msra.mxu0 0
    %238 = vmatprep.subr.bf16.mxu0 0
    %239 = vmatpush2.bf16.msra.mxu0 0
    %240 = vmatprep.mubr.bf16.mxu0 0
    %241 = vmatmul.mubr.bf16.gmra.mxu0 %v185
    %v242 = vpop.f32.mrf.mxu0
    %v243 = vadd.f32 0.0, %v242
    %v244 = vpop.f32.mrf.mxu0
    %v245 = vpop.f32.mrf.mxu0
    %v246 = vadd.f32 0.0, %v245
    %v247 = vpop.f32.mrf.mxu0
    %248 = vmatprep.mubr.bf16.mxu0 0
    %249 = vmatmul.mubr.bf16.gmra.mxu0 %v188
    %v250 = vpop.f32.mrf.mxu0
    %v251 = vadd.f32 0.0, %v250
    %v252 = vpop.f32.mrf.mxu0
    %v253 = vpop.f32.mrf.mxu0
    %v254 = vadd.f32 0.0, %v253
    %v255 = vpop.f32.mrf.mxu0
    %256 = vmatprep.mubr.bf16.mxu0 0
    %257 = vmatmul.mubr.bf16.gmra.mxu0 %v191
    %v258 = vpop.f32.mrf.mxu0
    %v259 = vadd.f32 0.0, %v258
    %v260 = vpop.f32.mrf.mxu0
    %v261 = vpop.f32.mrf.mxu0
    %v262 = vadd.f32 0.0, %v261
    %v263 = vpop.f32.mrf.mxu0
    %264 = vmatprep.mubr.bf16.mxu0 0
    %265 = vmatmul.mubr.bf16.gmra.mxu0 %v194
    %v266 = vpop.f32.mrf.mxu0
    %v267 = vadd.f32 0.0, %v266
    %v268 = vpop.f32.mrf.mxu0
    %v269 = vpop.f32.mrf.mxu0
    %v270 = vadd.f32 0.0, %v269
    %v271 = vpop.f32.mrf.mxu0
    %272 = vmatprep.mubr.bf16.mxu0 0
    %273 = vmatmul.mubr.bf16.gmra.mxu0 %v197
    %v274 = vpop.f32.mrf.mxu0
    %v275 = vadd.f32 0.0, %v274
    %v276 = vpop.f32.mrf.mxu0
    %v277 = vpop.f32.mrf.mxu0
    %v278 = vadd.f32 0.0, %v277
    %v279 = vpop.f32.mrf.mxu0
    %280 = vmatprep.mubr.bf16.mxu0 0
    %281 = vmatmul.mubr.bf16.gmra.mxu0 %v200
    %v282 = vpop.f32.mrf.mxu0
    %v283 = vadd.f32 0.0, %v282
    %v284 = vpop.f32.mrf.mxu0
    %v285 = vpop.f32.mrf.mxu0
    %v286 = vadd.f32 0.0, %v285
    %v287 = vpop.f32.mrf.mxu0
    %288 = vmatprep.mubr.bf16.mxu0 0
    %289 = vmatmul.mubr.bf16.gmra.mxu0 %v203
    %v290 = vpop.f32.mrf.mxu0
    %v291 = vadd.f32 0.0, %v290
    %v292 = vpop.f32.mrf.mxu0
    %v293 = vpop.f32.mrf.mxu0
    %v294 = vadd.f32 0.0, %v293
    %v295 = vpop.f32.mrf.mxu0
    %296 = vmatprep.mubr.bf16.mxu0 0
    %297 = vmatmul.mubr.bf16.gmra.mxu0 %v206
    %v298 = vpop.f32.mrf.mxu0
    %v299 = vadd.f32 0.0, %v298
    %v300 = vpop.f32.mrf.mxu0
    %v301 = vpop.f32.mrf.mxu0
    %v302 = vadd.f32 0.0, %v301
    %v303 = vpop.f32.mrf.mxu0
    %304 = vdwg.mxu0
    %v305 = vld [vmem:[%s4] sm:$0xff]
    %v306 = vld [vmem:[%s4 + $0x8] sm:$0xff]
    %v307 = vld [vmem:[%s4 + $0x10] sm:$0xff]
    %v308 = vld [vmem:[%s4 + $0x18] sm:$0xff]
    %v309 = vld [vmem:[%s4 + $0x20] sm:$0xff]
    %v310 = vld [vmem:[%s4 + $0x28] sm:$0xff]
    %v311 = vld [vmem:[%s4 + $0x30] sm:$0xff]
    %v312 = vld [vmem:[%s4 + $0x38] sm:$0xff]
    %v313 = vld [vmem:[%s4 + $0x40] sm:$0xff]
    %v314 = vld [vmem:[%s4 + $0x48] sm:$0xff]
    %v315 = vld [vmem:[%s4 + $0x50] sm:$0xff]
    %v316 = vld [vmem:[%s4 + $0x58] sm:$0xff]
    %v317 = vld [vmem:[%s4 + $0x60] sm:$0xff]
    %v318 = vld [vmem:[%s4 + $0x68] sm:$0xff]
    %v319 = vld [vmem:[%s4 + $0x70] sm:$0xff]
    %v320 = vld [vmem:[%s4 + $0x78] sm:$0xff]
    %322 = vset.pattern.permute.xlu0 0
    %323 = vperm.xlu0 %322, %v305
    %v324 = vpop.permute.xlu0 %323
    %327 = vset.pattern.permute.xlu0 0
    %328 = vperm.xlu0 %327, %v306
    %v329 = vpop.permute.xlu0 %328
    %332 = vset.pattern.permute.xlu0 0
    %333 = vperm.xlu0 %332, %v307
    %v334 = vpop.permute.xlu0 %333
    %337 = vset.pattern.permute.xlu0 0
    %338 = vperm.xlu0 %337, %v308
    %v339 = vpop.permute.xlu0 %338
    %342 = vset.pattern.permute.xlu0 0
    %343 = vperm.xlu0 %342, %v309
    %v344 = vpop.permute.xlu0 %343
    %347 = vset.pattern.permute.xlu0 0
    %348 = vperm.xlu0 %347, %v310
    %v349 = vpop.permute.xlu0 %348
    %352 = vset.pattern.permute.xlu0 0
    %353 = vperm.xlu0 %352, %v311
    %v354 = vpop.permute.xlu0 %353
    %357 = vset.pattern.permute.xlu0 0
    %358 = vperm.xlu0 %357, %v312
    %v359 = vpop.permute.xlu0 %358
    %362 = vset.pattern.permute.xlu0 0
    %363 = vperm.xlu0 %362, %v313
    %v364 = vpop.permute.xlu0 %363
    %367 = vset.pattern.permute.xlu0 0
    %368 = vperm.xlu0 %367, %v314
    %v369 = vpop.permute.xlu0 %368
    %372 = vset.pattern.permute.xlu0 0
    %373 = vperm.xlu0 %372, %v315
    %v374 = vpop.permute.xlu0 %373
    %377 = vset.pattern.permute.xlu0 0
    %378 = vperm.xlu0 %377, %v316
    %v379 = vpop.permute.xlu0 %378
    %382 = vset.pattern.permute.xlu0 0
    %383 = vperm.xlu0 %382, %v317
    %v384 = vpop.permute.xlu0 %383
    %387 = vset.pattern.permute.xlu0 0
    %388 = vperm.xlu0 %387, %v318
    %v389 = vpop.permute.xlu0 %388
    %392 = vset.pattern.permute.xlu0 0
    %393 = vperm.xlu0 %392, %v319
    %v394 = vpop.permute.xlu0 %393
    %397 = vset.pattern.permute.xlu0 0
    %398 = vperm.xlu0 %397, %v320
    %v399 = vpop.permute.xlu0 %398
    %v401 = vsub.f32 %v324, %v243
    %v402 = vsub.f32 %v329, %v246
    %v403 = vsub.f32 %v334, %v251
    %v404 = vsub.f32 %v339, %v254
    %v405 = vsub.f32 %v344, %v259
    %v406 = vsub.f32 %v349, %v262
    %v407 = vsub.f32 %v354, %v267
    %v408 = vsub.f32 %v359, %v270
    %v409 = vsub.f32 %v364, %v275
    %v410 = vsub.f32 %v369, %v278
    %v411 = vsub.f32 %v374, %v283
    %v412 = vsub.f32 %v379, %v286
    %v413 = vsub.f32 %v384, %v291
    %v414 = vsub.f32 %v389, %v294
    %v415 = vsub.f32 %v394, %v299
    %v416 = vsub.f32 %v399, %v302
    %v433 = vlaneseq
    %v434 = vshrl.u32 %v433, 7
    %v435 = vadd.s32 %v434, 8
    %v436 = vadd.s32 %v434, 16
    %v437 = vadd.s32 %v434, 24
    %v438 = vadd.s32 %v434, 32
    %v439 = vadd.s32 %v434, 40
    %v440 = vadd.s32 %v434, 48
    %v441 = vadd.s32 %v434, 56
    %v442 = vadd.s32 %v434, 64
    %v443 = vadd.s32 %v434, 72
    %v444 = vadd.s32 %v434, 80
    %v445 = vadd.s32 %v434, 88
    %v446 = vadd.s32 %v434, 96
    %v447 = vadd.s32 %v434, 104
    %v448 = vadd.s32 %v434, 112
    %v449 = vadd.s32 %v434, 120
    %v450 = vand.u32 %v401, 4294967168
    %v451 = vand.u32 %v402, 4294967168
    %v452 = vand.u32 %v403, 4294967168
    %v453 = vand.u32 %v404, 4294967168
    %v454 = vand.u32 %v405, 4294967168
    %v455 = vand.u32 %v406, 4294967168
    %v456 = vand.u32 %v407, 4294967168
    %v457 = vand.u32 %v408, 4294967168
    %v458 = vand.u32 %v409, 4294967168
    %v459 = vand.u32 %v410, 4294967168
    %v460 = vand.u32 %v411, 4294967168
    %v461 = vand.u32 %v412, 4294967168
    %v462 = vand.u32 %v413, 4294967168
    %v463 = vand.u32 %v414, 4294967168
    %v464 = vand.u32 %v415, 4294967168
    %v465 = vand.u32 %v416, 4294967168
    %v466 = vor.u32 %v450, %v434
    %v467 = vor.u32 %v451, %v435
    %v468 = vor.u32 %v452, %v436
    %v469 = vor.u32 %v453, %v437
    %v470 = vor.u32 %v454, %v438
    %v471 = vor.u32 %v455, %v439
    %v472 = vor.u32 %v456, %v440
    %v473 = vor.u32 %v457, %v441
    %v474 = vor.u32 %v458, %v442
    %v475 = vor.u32 %v459, %v443
    %v476 = vor.u32 %v460, %v444
    %v477 = vor.u32 %v461, %v445
    %v478 = vor.u32 %v462, %v446
    %v479 = vor.u32 %v463, %v447
    %v480 = vor.u32 %v464, %v448
    %v481 = vor.u32 %v465, %v449
    %v498 = vmin.f32 %v466, %v470
    %v499 = vmin.f32 %v467, %v471
    %v500 = vmin.f32 %v468, %v472
    %v501 = vmin.f32 %v469, %v473
    %v502 = vmin.f32 %v498, %v499
    %v503 = vmin.f32 %v500, %v501
    %v504 = vmin.f32 %v502, %v503
    %v505 = vrot.slane %v504, 4
    %v506 = vmin.f32 %v504, %v505
    %v507 = vrot.slane %v506, 2
    %v508 = vmin.f32 %v506, %v507
    %v509 = vrot.slane %v508, 1
    %v510 = vmin.f32 %v508, %v509
    %v512 = vand.u32 %v510, 127
    %v513 = vmin.f32 %v474, %v478
    %v514 = vmin.f32 %v475, %v479
    %v515 = vmin.f32 %v476, %v480
    %v516 = vmin.f32 %v477, %v481
    %v517 = vmin.f32 %v513, %v514
    %v518 = vmin.f32 %v515, %v516
    %v519 = vmin.f32 %v517, %v518
    %v520 = vrot.slane %v519, 4
    %v521 = vmin.f32 %v519, %v520
    %v522 = vrot.slane %v521, 2
    %v523 = vmin.f32 %v521, %v522
    %v524 = vrot.slane %v523, 1
    %v525 = vmin.f32 %v523, %v524
    %v527 = vand.u32 %v525, 127
    %v528 = vsub.s32 %v527, 64
    %vm529 = vcmask 1040384
    %v530 = vsel %vm529, %v512, %v528
    %531 = vst [vmem:[#allocation2] sm:$0x3] %v530
    // Predicated region
    $region22: #{tpu_custom_call.1} parent=1 // pred_check
      _
    $region23: #{tpu_custom_call.1} parent=1 // pred_check_branch
      %533 = sbr.rel (0) target = $region25
    $region24: #{tpu_custom_call.1} parent=1 // pred_region
      %s535 = ssub.s32 32, 32
      %536 = vsyncadd [#allocation3], %s535
      %s538 = sshll.u32 [#allocation2], 4
      %s539 = int_to_ptr.vmem [resolvable:$true] %s538
      %541 = dma.vmem_to_hbm [thread:$0]  %s539, 32, %s5, [#allocation3]
    $region25: #{tpu_custom_call.1} parent=1 // pred_fallthru
      _
    // Predicated region
    $region26: #{tpu_custom_call.1} parent=1 // pred_check
      _
    $region27: #{tpu_custom_call.1} parent=1 // pred_check_branch
      %543 = sbr.rel (0) target = $region29
    $region28: #{tpu_custom_call.1} parent=1 // pred_region
      %544 = dma.done [#allocation3], 32
    $region29: #{tpu_custom_call.1} parent=1 // pred_fallthru
      _
    %545 = vsyncpa [#allocation3], 1

</llo_original>
